<compile_context>
chip_gen: v5e
topology: v5e:2x2
jax: 0.10.0
libtpu: 0.0.40
codegen_flags: <defaults>
</compile_context>

<pallas_src>
import math

import jax
import jax.numpy as jnp
from jax import lax
from jax.experimental import pallas as pl
from jax.experimental.pallas import tpu as pltpu


def _full_attention_kernel(q_ref, k_ref, v_ref, o_ref, a_ref):
    # q_ref: (tl, C), k_ref: (S, C), v_ref: (S, D), o_ref: (tl, D), a_ref: (tl, S)
    c = q_ref.shape[-1]
    scale = 1.0 / math.sqrt(c)

    q = q_ref[...] * scale          # fold 1/sqrt(C) into Q (L*C, not L*S, multiplies)
    k = k_ref[...]
    v = v_ref[...]

    # scores = Q @ K^T via NT contraction (contract last dims), f32 accumulation.
    scores = lax.dot_general(
        q, k,
        dimension_numbers=(((1,), (1,)), ((), ())),
        preferred_element_type=jnp.float32,
    )

    # Row-wise softmax in f32 (numerically stable; exact under L-tiling).
    m = jnp.max(scores, axis=-1, keepdims=True)
    e = jnp.exp(scores - m)
    denom = jnp.sum(e, axis=-1, keepdims=True)
    inv = pl.reciprocal(denom, approx=True)       # EUP slot, one recip per row
    inv = inv * (2.0 - denom * inv)               # 1 Newton step on (tl, 1): ~f32 accuracy
    a = e * inv                                    # (tl, S) multiply, no VALU divide

    # Single down-cast, reused for both the A store and the A @ V matmul.
    a_lo = a.astype(v.dtype)
    a_ref[...] = a_lo if a_ref.dtype == v.dtype else a.astype(a_ref.dtype)

    out = jnp.dot(a_lo, v, preferred_element_type=jnp.float32)
    o_ref[...] = out.astype(o_ref.dtype)


def _full_attention_bhlc(q, k, v, *, block_l=256, vmem_limit_bytes=None):
    """Attention on per-head layout: q (B,H,L,C), k (B,H,S,C), v (B,H,S,D).

    Returns V (B,H,L,D) and A (B,H,L,S).
    """
    B, H, L, C = q.shape
    S, D = v.shape[-2], v.shape[-1]

    # L-tile: multiple of 8 (sublane) and dividing L, else fall back to full L.
    tl = min(block_l, L)
    if L % tl != 0 or tl % 8 != 0:
        tl = L

    if vmem_limit_bytes is None:
        itm = jnp.dtype(q.dtype).itemsize
        est = (
            2 * (tl * C + tl * D + tl * S) * itm      # double-buffered q / o / a tiles
            + 2 * (S * C + S * D) * itm               # resident (double-buffered) K / V
            + 3 * tl * S * 4                          # f32 score/softmax temporaries
        )
        # Never below the 32 MiB scoped default, never above v7x physical VMEM.
        vmem_limit_bytes = int(min(max(32 * 1024 * 1024, 2 * est), 64 * 1024 * 1024))

    grid = (B, H, L // tl)

    v_out, a_out = pl.pallas_call(
        _full_attention_kernel,
        out_shape=(
            jax.ShapeDtypeStruct((B, H, L, D), q.dtype),
            jax.ShapeDtypeStruct((B, H, L, S), q.dtype),
        ),
        grid_spec=pltpu.PrefetchScalarGridSpec(
            num_scalar_prefetch=0,
            grid=grid,
            in_specs=[
                # Q: one L-tile per step.
                pl.BlockSpec((None, None, tl, C), lambda b, h, l: (b, h, l, 0)),
                # K/V: ignore the L-tile axis -> stay resident across L-tiles.
                pl.BlockSpec((None, None, S, C), lambda b, h, l: (b, h, 0, 0)),
                pl.BlockSpec((None, None, S, D), lambda b, h, l: (b, h, 0, 0)),
            ],
            out_specs=(
                pl.BlockSpec((None, None, tl, D), lambda b, h, l: (b, h, l, 0)),
                pl.BlockSpec((None, None, tl, S), lambda b, h, l: (b, h, l, 0)),
            ),
        ),
        compiler_params=pltpu.CompilerParams(
            dimension_semantics=("parallel", "parallel", "parallel"),
            vmem_limit_bytes=vmem_limit_bytes,
        ),
    )(q, k, v)
    return v_out, a_out


def full_attention(queries, keys, values, *, block_l=256):
    """Pallas equivalent of FullAttention.forward (mask_flag=False, eval).

    queries: (B, L, H, C); keys: (B, S, H, C); values: (B, S, H, D)
    returns: V (B, L, H, D), A (B, H, L, S)
    """
    # One-time layout change to per-head-contiguous (B, H, *, *); see header
    # comment — call _full_attention_bhlc directly if data is already (B,H,...).
    q_bhlc = jnp.transpose(queries, (0, 2, 1, 3))
    k_bhsc = jnp.transpose(keys, (0, 2, 1, 3))
    v_bhsd = jnp.transpose(values, (0, 2, 1, 3))

    v_out, a_out = _full_attention_bhlc(q_bhlc, k_bhsc, v_bhsd, block_l=block_l)

    # V back to (B, L, H, D) like torch .permute(0, 2, 1, 3).
    return jnp.transpose(v_out, (0, 2, 1, 3)), a_out


def _reference(queries, keys, values):
    B, L, H, C = queries.shape
    scale = 1.0 / math.sqrt(C)
    q = jnp.transpose(queries, (0, 2, 1, 3)).astype(jnp.float32)
    k = jnp.transpose(keys, (0, 2, 1, 3)).astype(jnp.float32)
    v = jnp.transpose(values, (0, 2, 1, 3)).astype(jnp.float32)
    scores = jnp.einsum("bhlc,bhsc->bhls", q, k)
    a = jax.nn.softmax(scores * scale, axis=-1)
    vo = jnp.einsum("bhls,bhsd->bhld", a, v)
    return jnp.transpose(vo, (0, 2, 1, 3)), a


if __name__ == "__main__":
    key = jax.random.PRNGKey(0)
    k1, k2, k3 = jax.random.split(key, 3)

    B, L, S, H, C, D = 2, 16, 16, 4, 32, 32
    queries = jax.random.normal(k1, (B, L, H, C), dtype=jnp.float32)
    keys = jax.random.normal(k2, (B, S, H, C), dtype=jnp.float32)
    values = jax.random.normal(k3, (B, S, H, D), dtype=jnp.float32)

    fa = jax.jit(full_attention)
    v_out, a_out = fa(queries, keys, values)
    jax.block_until_ready((v_out, a_out))

    v_ref, a_ref = _reference(queries, keys, values)
    assert v_out.shape == (B, L, H, D)
    assert a_out.shape == (B, H, L, S)
    assert jnp.allclose(v_out, v_ref, atol=1e-4, rtol=1e-4)
    assert jnp.allclose(a_out, a_ref, atol=1e-4, rtol=1e-4)

    print("KERNEL_OK")
</pallas_src>

<mosaic_0001>
module attributes {stable_mosaic.version = 11 : i64} {
  func.func @_full_attention_kernel(%arg0: i32, %arg1: i32, %arg2: i32, %arg3: memref<1x1x16x32xf32, #tpu.memory_space<vmem>>, %arg4: memref<1x1x16x32xf32, #tpu.memory_space<vmem>>, %arg5: memref<1x1x16x32xf32, #tpu.memory_space<vmem>>, %arg6: memref<1x1x16x32xf32, #tpu.memory_space<vmem>>, %arg7: memref<1x1x16x16xf32, #tpu.memory_space<vmem>>) attributes {dimension_semantics = [#tpu.dimension_semantics<parallel>, #tpu.dimension_semantics<parallel>, #tpu.dimension_semantics<parallel>], iteration_bounds = array<i64: 2, 4, 1>, scalar_prefetch = 0 : i64, scratch_operands = 0 : i64, tpu.core_type = #tpu.core_type<tc>, window_params = [{transform_indices = @transform_0, window_bounds = array<i64: 1, 1, 16, 32>}, {transform_indices = @transform_1, window_bounds = array<i64: 1, 1, 16, 32>}, {transform_indices = @transform_2, window_bounds = array<i64: 1, 1, 16, 32>}, {transform_indices = @transform_3, window_bounds = array<i64: 1, 1, 16, 32>}, {transform_indices = @transform_4, window_bounds = array<i64: 1, 1, 16, 16>}]} {
    %c0 = arith.constant 0 : index
    %c0_0 = arith.constant 0 : index
    %c0_1 = arith.constant 0 : index
    %c0_2 = arith.constant 0 : index
    %0 = vector.load %arg3[%c0, %c0_0, %c0_1, %c0_2] : memref<1x1x16x32xf32, #tpu.memory_space<vmem>>, vector<1x1x16x32xf32>
    %1 = vector.shape_cast %0 : vector<1x1x16x32xf32> to vector<16x32xf32>
    %cst = arith.constant 0.176776692 : f32
    %2 = vector.broadcast %cst : f32 to vector<16x32xf32>
    %3 = arith.mulf %1, %2 : vector<16x32xf32>
    %c0_3 = arith.constant 0 : index
    %c0_4 = arith.constant 0 : index
    %c0_5 = arith.constant 0 : index
    %c0_6 = arith.constant 0 : index
    %4 = vector.load %arg4[%c0_3, %c0_4, %c0_5, %c0_6] : memref<1x1x16x32xf32, #tpu.memory_space<vmem>>, vector<1x1x16x32xf32>
    %5 = vector.shape_cast %4 : vector<1x1x16x32xf32> to vector<16x32xf32>
    %c0_7 = arith.constant 0 : index
    %c0_8 = arith.constant 0 : index
    %c0_9 = arith.constant 0 : index
    %c0_10 = arith.constant 0 : index
    %6 = vector.load %arg5[%c0_7, %c0_8, %c0_9, %c0_10] : memref<1x1x16x32xf32, #tpu.memory_space<vmem>>, vector<1x1x16x32xf32>
    %7 = vector.shape_cast %6 : vector<1x1x16x32xf32> to vector<16x32xf32>
    %cst_11 = arith.constant dense<0.000000e+00> : vector<16x16xf32>
    %8 = tpu.matmul %3, %5, %cst_11 {dimension_numbers = #tpu.dot_dimension_numbers<[1], [1], [0], [0], [0, 0, 1, 0], [], []>} : vector<16x32xf32>, vector<16x32xf32>, vector<16x16xf32> -> vector<16x16xf32>
    %cst_12 = arith.constant dense<0xFF800000> : vector<16xf32>
    %9 = vector.multi_reduction <maximumf>, %8, %cst_12 [1] : vector<16x16xf32> to vector<16xf32>
    %10 = vector.shape_cast %9 : vector<16xf32> to vector<16x1xf32>
    %11 = vector.broadcast %10 : vector<16x1xf32> to vector<16x16xf32>
    %12 = arith.subf %8, %11 : vector<16x16xf32>
    %13 = math.exp %12 : vector<16x16xf32>
    %cst_13 = arith.constant dense<0.000000e+00> : vector<16xf32>
    %14 = vector.multi_reduction <add>, %13, %cst_13 [1] : vector<16x16xf32> to vector<16xf32>
    %15 = vector.shape_cast %14 : vector<16xf32> to vector<16x1xf32>
    %16 = tpu.reciprocal %15 {approx = true} : vector<16x1xf32> -> vector<16x1xf32>
    %17 = arith.mulf %15, %16 : vector<16x1xf32>
    %cst_14 = arith.constant 2.000000e+00 : f32
    %18 = vector.broadcast %cst_14 : f32 to vector<16x1xf32>
    %19 = arith.subf %18, %17 : vector<16x1xf32>
    %20 = arith.mulf %16, %19 : vector<16x1xf32>
    %21 = vector.broadcast %20 : vector<16x1xf32> to vector<16x16xf32>
    %22 = arith.mulf %13, %21 : vector<16x16xf32>
    %c0_15 = arith.constant 0 : index
    %c0_16 = arith.constant 0 : index
    %c0_17 = arith.constant 0 : index
    %c0_18 = arith.constant 0 : index
    %23 = vector.load %arg7[%c0_15, %c0_16, %c0_17, %c0_18] : memref<1x1x16x16xf32, #tpu.memory_space<vmem>>, vector<1x1x16x16xf32>
    %24 = vector.shape_cast %23 : vector<1x1x16x16xf32> to vector<16x16xf32>
    %25 = vector.shape_cast %22 : vector<16x16xf32> to vector<1x1x16x16xf32>
    tpu.vector_store %arg7[%c0_15, %c0_16, %c0_17, %c0_18], %25 {strides = array<i32>} : memref<1x1x16x16xf32, #tpu.memory_space<vmem>>, vector<1x1x16x16xf32>,
    %cst_19 = arith.constant dense<0.000000e+00> : vector<16x32xf32>
    %26 = tpu.matmul %22, %7, %cst_19 {dimension_numbers = #tpu.dot_dimension_numbers<[1], [0], [0], [1], [0, 0, 1, 1], [], []>} : vector<16x16xf32>, vector<16x32xf32>, vector<16x32xf32> -> vector<16x32xf32>
    %c0_20 = arith.constant 0 : index
    %c0_21 = arith.constant 0 : index
    %c0_22 = arith.constant 0 : index
    %c0_23 = arith.constant 0 : index
    %27 = vector.load %arg6[%c0_20, %c0_21, %c0_22, %c0_23] : memref<1x1x16x32xf32, #tpu.memory_space<vmem>>, vector<1x1x16x32xf32>
    %28 = vector.shape_cast %27 : vector<1x1x16x32xf32> to vector<16x32xf32>
    %29 = vector.shape_cast %26 : vector<16x32xf32> to vector<1x1x16x32xf32>
    tpu.vector_store %arg6[%c0_20, %c0_21, %c0_22, %c0_23], %29 {strides = array<i32>} : memref<1x1x16x32xf32, #tpu.memory_space<vmem>>, vector<1x1x16x32xf32>,
    return
  }
  func.func @transform_0(%arg0: i32, %arg1: i32, %arg2: i32) -> (i32, i32, i32, i32) {
    %c0_i32 = arith.constant 0 : i32
    %c0_i32_0 = arith.constant 0 : i32
    return %arg0, %arg1, %arg2, %c0_i32 : i32, i32, i32, i32
  }
  func.func @transform_1(%arg0: i32, %arg1: i32, %arg2: i32) -> (i32, i32, i32, i32) {
    %c0_i32 = arith.constant 0 : i32
    %c0_i32_0 = arith.constant 0 : i32
    %c0_i32_1 = arith.constant 0 : i32
    return %arg0, %arg1, %c0_i32, %c0_i32_0 : i32, i32, i32, i32
  }
  func.func @transform_2(%arg0: i32, %arg1: i32, %arg2: i32) -> (i32, i32, i32, i32) {
    %c0_i32 = arith.constant 0 : i32
    %c0_i32_0 = arith.constant 0 : i32
    %c0_i32_1 = arith.constant 0 : i32
    return %arg0, %arg1, %c0_i32, %c0_i32_0 : i32, i32, i32, i32
  }
  func.func @transform_3(%arg0: i32, %arg1: i32, %arg2: i32) -> (i32, i32, i32, i32) {
    %c0_i32 = arith.constant 0 : i32
    %c0_i32_0 = arith.constant 0 : i32
    return %arg0, %arg1, %arg2, %c0_i32 : i32, i32, i32, i32
  }
  func.func @transform_4(%arg0: i32, %arg1: i32, %arg2: i32) -> (i32, i32, i32, i32) {
    %c0_i32 = arith.constant 0 : i32
    %c0_i32_0 = arith.constant 0 : i32
    return %arg0, %arg1, %arg2, %c0_i32 : i32, i32, i32, i32
  }
}

</mosaic_0001>

<llo_original>
// kernel: full_attention.1
$region0: #{full_attention.1}
  #allocation0 [shape = 'u32[]', space=smem, size = 0x4, offset = 0x4, fixed_abs, tag = 'smem constant byte address 0x4 - core index']
  #allocation1 [shape = 'u32[72,128]{1,0:T(1,128)}', space=vmem, size = 0x9000, scoped, tag = 'internal scratch']
  %s0 = inlined_call_operand.vmem [shape: f32[2,4,16,32], index: 0, kind: input, shape index: {}]
  %s1 = inlined_call_operand.vmem [shape: f32[2,4,16,32], index: 1, kind: input, shape index: {}]
  %s2 = inlined_call_operand.vmem [shape: f32[2,4,16,32], index: 2, kind: input, shape index: {}]
  %s3 = inlined_call_operand.vmem [shape: f32[2,4,16,32], index: 3, kind: output, shape index: {0}]
  %s4 = inlined_call_operand.hbm [shape: f32[2,4,16,16], index: 4, kind: output, shape index: {1}]
  %5 = xla_tuple %s3, %s4
  %s6 = sld [smem:[#allocation0]]
  $region53: #{full_attention.1} parent=0
    _
  %s8 = ssub.s32 1, %s6
  %s9 = scalar_select 0, %s8, %s6
  $region1: #{full_attention.1} parent=0
    #allocation2 [shape = 'u8[16384]{0}', space=vmem, size = 0x4000, scoped, tag = 'output window, operand 1']
    #allocation3 [shape = 's32[2]{0}', space=sflag, size = 0x8, scoped, tag = 'scoped memory for full_attention.1']
    %10 = vsyncpa [#allocation3], 0
    %s11 = scalar_lea.sflag [#allocation3], 1
    %12 = vsyncpa %s11, 0
    loop: start=0, step=1, limit=10
    $region2: #{full_attention.1} parent=1 // loop_pre_header
      _
    $region3: #{full_attention.1} parent=1 // loop_header
      %s14 = sphi 0, %s18
      %p15 = scmp.ge.s32.totalorder %s14, 10
      %s21 = sphi 0, %s40
      %s22 = sphi 0, %s36
      %s23 = sphi 0, %s32
      %s24 = sphi 0, %s21
      %s25 = sphi 0, %s22
      %s26 = sphi 0, %s23
      %s27 = sphi 0, %s24
      %s28 = sphi 0, %s25
      %s29 = sphi 0, %s26
      %s47 = sphi 0, %s49
      %s50 = sphi 0, %s47
      %s51 = sphi 0, %s50
      %s67 = sphi 0, %s51
      %s75 = sphi 0, %s77
      %s78 = sphi 0, %s75
      %s79 = sphi 0, %s78
      %s95 = sphi 0, %s79
      %s103 = sphi 0, %s105
      %s106 = sphi 0, %s103
      %s107 = sphi 0, %s106
      %s123 = sphi 0, %s107
      %s133 = sphi 0, %s135
      %s136 = sphi 0, %s133
      %s137 = sphi 0, %s136
      %s153 = sphi 0, %s137
      %s163 = sphi 0, %s165
      %s166 = sphi 0, %s163
      %s167 = sphi 0, %s166
      %s183 = sphi 0, %s167
    $region4: #{full_attention.1} parent=1 // loop_header_branch
      %17 = sbr.rel (%p15) target = $region8
    $region5: #{full_attention.1} parent=1 // loop_body
      %s19 = ssub.s32 %s14, 1
      %s20 = ssub.s32 %s14, 2
      %s30 = sadd.s32 1, %s23
      %p31 = scmp.ge.s32.totalorder %s30, 1
      %s32 = scalar_select %p31, 0, %s30
      %s33 = sadd.s32 1, %s22
      %s34 = scalar_select %p31, %s33, %s22
      %p35 = scmp.ge.s32.totalorder %s34, 4
      %s36 = scalar_select %p35, 0, %s34
      %s37 = sadd.s32 1, %s21
      %s38 = scalar_select %p35, %s37, %s21
      %p39 = scmp.ge.s32.totalorder %s38, 2
      %s40 = scalar_select %p39, 0, %s38
      %s41 = ssub.s32 %s21, %s40
      %s42 = ssub.s32 %s22, %s36
      %s43 = sor.u32 %s41, %s42
      %s44 = ssub.s32 %s23, %s32
      %s45 = sor.u32 %s43, %s44
      %p46 = scmp.eq.s32.totalorder %s45, 0
      %s48 = sadd.s32 %s47, 1
      %s49 = scalar_select %p46, %s47, %s48
      %p52 = pneg %p46
      %p53 = scmp.eq.s32.totalorder %s14, 7
      %p54 = por %p52, %p53
      %p55 = scmp.ne.s32.totalorder %s47, %s50
      %p56 = scmp.eq.s32.totalorder %s14, 0
      %p57 = por %p55, %p56
      %p58 = scmp.ne.s32.totalorder %s47, %s50
      %p59 = scmp.eq.s32.totalorder %s19, 7
      %p60 = por %p58, %p59
      %p61 = scmp.ne.s32.totalorder %s50, %s51
      %p62 = scmp.eq.s32.totalorder %s19, 0
      %p63 = por %p61, %p62
      %p64 = scmp.ne.s32.totalorder %s50, %s51
      %p65 = scmp.eq.s32.totalorder %s20, 7
      %p66 = por %p64, %p65
      %p68 = scmp.ne.s32.totalorder %s51, %s67
      %p69 = scmp.eq.s32.totalorder %s20, 0
      %p70 = por %p68, %p69
      %s71 = ssub.s32 %s21, %s40
      %s72 = ssub.s32 %s22, %s36
      %s73 = sor.u32 %s71, %s72
      %p74 = scmp.eq.s32.totalorder %s73, 0
      %s76 = sadd.s32 %s75, 1
      %s77 = scalar_select %p74, %s75, %s76
      %p80 = pneg %p74
      %p81 = scmp.eq.s32.totalorder %s14, 7
      %p82 = por %p80, %p81
      %p83 = scmp.ne.s32.totalorder %s75, %s78
      %p84 = scmp.eq.s32.totalorder %s14, 0
      %p85 = por %p83, %p84
      %p86 = scmp.ne.s32.totalorder %s75, %s78
      %p87 = scmp.eq.s32.totalorder %s19, 7
      %p88 = por %p86, %p87
      %p89 = scmp.ne.s32.totalorder %s78, %s79
      %p90 = scmp.eq.s32.totalorder %s19, 0
      %p91 = por %p89, %p90
      %p92 = scmp.ne.s32.totalorder %s78, %s79
      %p93 = scmp.eq.s32.totalorder %s20, 7
      %p94 = por %p92, %p93
      %p96 = scmp.ne.s32.totalorder %s79, %s95
      %p97 = scmp.eq.s32.totalorder %s20, 0
      %p98 = por %p96, %p97
      %s99 = ssub.s32 %s21, %s40
      %s100 = ssub.s32 %s22, %s36
      %s101 = sor.u32 %s99, %s100
      %p102 = scmp.eq.s32.totalorder %s101, 0
      %s104 = sadd.s32 %s103, 1
      %s105 = scalar_select %p102, %s103, %s104
      %p108 = pneg %p102
      %p109 = scmp.eq.s32.totalorder %s14, 7
      %p110 = por %p108, %p109
      %p111 = scmp.ne.s32.totalorder %s103, %s106
      %p112 = scmp.eq.s32.totalorder %s14, 0
      %p113 = por %p111, %p112
      %p114 = scmp.ne.s32.totalorder %s103, %s106
      %p115 = scmp.eq.s32.totalorder %s19, 7
      %p116 = por %p114, %p115
      %p117 = scmp.ne.s32.totalorder %s106, %s107
      %p118 = scmp.eq.s32.totalorder %s19, 0
      %p119 = por %p117, %p118
      %p120 = scmp.ne.s32.totalorder %s106, %s107
      %p121 = scmp.eq.s32.totalorder %s20, 7
      %p122 = por %p120, %p121
      %p124 = scmp.ne.s32.totalorder %s107, %s123
      %p125 = scmp.eq.s32.totalorder %s20, 0
      %p126 = por %p124, %p125
      %s127 = ssub.s32 %s21, %s40
      %s128 = ssub.s32 %s22, %s36
      %s129 = sor.u32 %s127, %s128
      %s130 = ssub.s32 %s23, %s32
      %s131 = sor.u32 %s129, %s130
      %p132 = scmp.eq.s32.totalorder %s131, 0
      %s134 = sadd.s32 %s133, 1
      %s135 = scalar_select %p132, %s133, %s134
      %p138 = pneg %p132
      %p139 = scmp.eq.s32.totalorder %s14, 7
      %p140 = por %p138, %p139
      %p141 = scmp.ne.s32.totalorder %s133, %s136
      %p142 = scmp.eq.s32.totalorder %s14, 0
      %p143 = por %p141, %p142
      %p144 = scmp.ne.s32.totalorder %s133, %s136
      %p145 = scmp.eq.s32.totalorder %s19, 7
      %p146 = por %p144, %p145
      %p147 = scmp.ne.s32.totalorder %s136, %s137
      %p148 = scmp.eq.s32.totalorder %s19, 0
      %p149 = por %p147, %p148
      %p150 = scmp.ne.s32.totalorder %s136, %s137
      %p151 = scmp.eq.s32.totalorder %s20, 7
      %p152 = por %p150, %p151
      %p154 = scmp.ne.s32.totalorder %s137, %s153
      %p155 = scmp.eq.s32.totalorder %s20, 0
      %p156 = por %p154, %p155
      %s157 = ssub.s32 %s21, %s40
      %s158 = ssub.s32 %s22, %s36
      %s159 = sor.u32 %s157, %s158
      %s160 = ssub.s32 %s23, %s32
      %s161 = sor.u32 %s159, %s160
      %p162 = scmp.eq.s32.totalorder %s161, 0
      %s164 = sadd.s32 %s163, 1
      %s165 = scalar_select %p162, %s163, %s164
      %p168 = pneg %p162
      %p169 = scmp.eq.s32.totalorder %s14, 7
      %p170 = por %p168, %p169
      %p171 = scmp.ne.s32.totalorder %s163, %s166
      %p172 = scmp.eq.s32.totalorder %s14, 0
      %p173 = por %p171, %p172
      %p174 = scmp.ne.s32.totalorder %s163, %s166
      %p175 = scmp.eq.s32.totalorder %s19, 7
      %p176 = por %p174, %p175
      %p177 = scmp.ne.s32.totalorder %s166, %s167
      %p178 = scmp.eq.s32.totalorder %s19, 0
      %p179 = por %p177, %p178
      %p180 = scmp.ne.s32.totalorder %s166, %s167
      %p181 = scmp.eq.s32.totalorder %s20, 7
      %p182 = por %p180, %p181
      %p184 = scmp.ne.s32.totalorder %s167, %s183
      %p185 = scmp.eq.s32.totalorder %s20, 0
      %p186 = por %p184, %p185
      %p187 = scmp.le.s32.totalorder 1, %s14
      %p188 = scmp.lt.s32.totalorder %s14, 9
      %p189 = pnand %p187, %p188
      %p190 = pneg %p189
      // Predicated region
      $region9: #{full_attention.1} parent=5 // pred_check
        _
      $region10: #{full_attention.1} parent=5 // pred_check_branch
        %192 = sbr.rel (%p189) target = $region12
      $region11: #{full_attention.1} parent=5 // pred_region
        %s193 = ssub.s32 %s14, 1
      $region12: #{full_attention.1} parent=5 // pred_fallthru
        _
      %p194 = scmp.lt.s32.totalorder %s14, 8
      // Predicated region
      $region13: #{full_attention.1} parent=5 // pred_check
        %p195 = pneg %p194
      $region14: #{full_attention.1} parent=5 // pred_check_branch
        %197 = sbr.rel (%p195) target = $region16
      $region15: #{full_attention.1} parent=5 // pred_region
        // Predicated region
        $region17: #{full_attention.1} parent=15 // pred_check
          %p198 = pneg %p57
        $region18: #{full_attention.1} parent=15 // pred_check_branch
          %200 = sbr.rel (%p198) target = $region20
        $region19: #{full_attention.1} parent=15 // pred_region
          %s201 = smul.u32 2, %s23
          %p202 = scmp.lt.s32.totalorder %s21, 1
          %s203 = scalar_select %p202, %s21, 1
          %p204 = scmp.lt.s32.totalorder %s22, 3
          %s205 = scalar_select %p204, %s22, 3
          %p206 = scmp.lt.s32.totalorder %s201, 1
          %s207 = scalar_select %p206, %s201, 1
          %s208 = smul.addr %s205, 2
          %s209 = sadd.s32 %s207, %s208
          %s210 = smul.addr %s203, 8
          %s211 = sadd.s32 %s209, %s210
          %s212 = smul.addr %s211, 8
          %s213 = scalar_lea.vmem %s0, %s212
          %s214 = smul.u32 2, %s23
        $region20: #{full_attention.1} parent=15 // pred_fallthru
          _
        // Predicated region
        $region21: #{full_attention.1} parent=15 // pred_check
          %p215 = pneg %p85
        $region22: #{full_attention.1} parent=15 // pred_check_branch
          %217 = sbr.rel (%p215) target = $region24
        $region23: #{full_attention.1} parent=15 // pred_region
          %p218 = scmp.lt.s32.totalorder %s21, 1
          %s219 = scalar_select %p218, %s21, 1
          %p220 = scmp.lt.s32.totalorder %s22, 3
          %s221 = scalar_select %p220, %s22, 3
          %s222 = smul.addr %s221, 2
          %s223 = smul.addr %s219, 8
          %s224 = sadd.s32 %s222, %s223
          %s225 = smul.addr %s224, 8
          %s226 = scalar_lea.vmem %s1, %s225
        $region24: #{full_attention.1} parent=15 // pred_fallthru
          _
        // Predicated region
        $region25: #{full_attention.1} parent=15 // pred_check
          %p227 = pneg %p113
        $region26: #{full_attention.1} parent=15 // pred_check_branch
          %229 = sbr.rel (%p227) target = $region28
        $region27: #{full_attention.1} parent=15 // pred_region
          %p230 = scmp.lt.s32.totalorder %s21, 1
          %s231 = scalar_select %p230, %s21, 1
          %p232 = scmp.lt.s32.totalorder %s22, 3
          %s233 = scalar_select %p232, %s22, 3
          %s234 = smul.addr %s233, 2
          %s235 = smul.addr %s231, 8
          %s236 = sadd.s32 %s234, %s235
          %s237 = smul.addr %s236, 8
          %s238 = scalar_lea.vmem %s2, %s237
        $region28: #{full_attention.1} parent=15 // pred_fallthru
          _
      $region16: #{full_attention.1} parent=5 // pred_fallthru
        _
      %p239 = scmp.le.s32.totalorder 1, %s14
      %p240 = scmp.lt.s32.totalorder %s14, 9
      %p241 = pnand %p239, %p240
      %p242 = pneg %p241
      // Predicated region
      $region29: #{full_attention.1} parent=5 // pred_check
        _
      $region30: #{full_attention.1} parent=5 // pred_check_branch
        %244 = sbr.rel (%p241) target = $region32
      $region31: #{full_attention.1} parent=5 // pred_region
        %s245 = ssub.s32 %s14, 1
        %s246 = smul.u32 2, %s26
        %p247 = scmp.lt.s32.totalorder %s24, 1
        %s248 = scalar_select %p247, %s24, 1
        %p249 = scmp.lt.s32.totalorder %s25, 3
        %s250 = scalar_select %p249, %s25, 3
        %p251 = scmp.lt.s32.totalorder %s246, 1
        %s252 = scalar_select %p251, %s246, 1
        %s253 = smul.addr %s250, 2
        %s254 = sadd.s32 %s252, %s253
        %s255 = smul.addr %s248, 8
        %s256 = sadd.s32 %s254, %s255
        %s257 = smul.addr %s256, 8
        %s258 = scalar_lea.vmem %s0, %s257
        %p259 = pneg %p63
        %p260 = pneg %p60
        %p261 = scmp.lt.s32.totalorder %s24, 1
        %s262 = scalar_select %p261, %s24, 1
        %p263 = scmp.lt.s32.totalorder %s25, 3
        %s264 = scalar_select %p263, %s25, 3
        %s265 = smul.addr %s264, 2
        %s266 = smul.addr %s262, 8
        %s267 = sadd.s32 %s265, %s266
        %s268 = smul.addr %s267, 8
        %s269 = scalar_lea.vmem %s1, %s268
        %p270 = pneg %p91
        %p271 = pneg %p88
        %p272 = scmp.lt.s32.totalorder %s24, 1
        %s273 = scalar_select %p272, %s24, 1
        %p274 = scmp.lt.s32.totalorder %s25, 3
        %s275 = scalar_select %p274, %s25, 3
        %s276 = smul.addr %s275, 2
        %s277 = smul.addr %s273, 8
        %s278 = sadd.s32 %s276, %s277
        %s279 = smul.addr %s278, 8
        %s280 = scalar_lea.vmem %s2, %s279
        %p281 = pneg %p119
        %p282 = pneg %p116
        %p283 = pneg %p149
        %p284 = pneg %p146
        %s285 = smul.u32 2, %s26
        %p286 = scmp.lt.s32.totalorder %s24, 1
        %s287 = scalar_select %p286, %s24, 1
        %p288 = scmp.lt.s32.totalorder %s25, 3
        %s289 = scalar_select %p288, %s25, 3
        %p290 = scmp.lt.s32.totalorder %s285, 1
        %s291 = scalar_select %p290, %s285, 1
        %s292 = smul.addr %s289, 2
        %s293 = sadd.s32 %s291, %s292
        %s294 = smul.addr %s287, 8
        %s295 = sadd.s32 %s293, %s294
        %s296 = smul.addr %s295, 8
        %s297 = scalar_lea.vmem %s3, %s296
        %p298 = pneg %p179
        %p299 = pneg %p176
        %s300 = sand.u32 %s166, 1
        %s301 = scalar_lea.sflag [#allocation3], %s300
        %s302 = sand.u32 %s166, 1
        %s303 = smul.addr %s302, 16
        %s304 = scalar_lea.vmem [#allocation2], %s303
        %s305 = smul.u32 2, %s26
        %p306 = scmp.lt.s32.totalorder %s24, 1
        %s307 = scalar_select %p306, %s24, 1
        %p308 = scmp.lt.s32.totalorder %s25, 3
        %s309 = scalar_select %p308, %s25, 3
        %p310 = scmp.lt.s32.totalorder %s305, 1
        %s311 = scalar_select %p310, %s305, 1
        %s312 = smul.addr %s309, 2
        %s313 = sadd.s32 %s311, %s312
        %s314 = smul.addr %s307, 8
        %s315 = sadd.s32 %s313, %s314
        %s316 = smul.addr %s315, 8
        %s317 = scalar_lea.vmem %s0, %s316
        %s318 = smul.u32 2, %s26
        %p319 = scmp.lt.s32.totalorder %s24, 1
        %s320 = scalar_select %p319, %s24, 1
        %p321 = scmp.lt.s32.totalorder %s25, 3
        %s322 = scalar_select %p321, %s25, 3
        %s323 = smul.addr %s322, 2
        %s324 = smul.addr %s320, 8
        %s325 = sadd.s32 %s323, %s324
        %s326 = smul.addr %s325, 8
        %s327 = scalar_lea.vmem %s1, %s326
        %p328 = scmp.lt.s32.totalorder %s24, 1
        %s329 = scalar_select %p328, %s24, 1
        %p330 = scmp.lt.s32.totalorder %s25, 3
        %s331 = scalar_select %p330, %s25, 3
        %s332 = smul.addr %s331, 2
        %s333 = smul.addr %s329, 8
        %s334 = sadd.s32 %s332, %s333
        %s335 = smul.addr %s334, 8
        %s336 = scalar_lea.vmem %s2, %s335
        %s337 = smul.u32 2, %s26
        %p338 = scmp.lt.s32.totalorder %s24, 1
        %s339 = scalar_select %p338, %s24, 1
        %p340 = scmp.lt.s32.totalorder %s25, 3
        %s341 = scalar_select %p340, %s25, 3
        %p342 = scmp.lt.s32.totalorder %s337, 1
        %s343 = scalar_select %p342, %s337, 1
        %s344 = smul.addr %s341, 2
        %s345 = sadd.s32 %s343, %s344
        %s346 = smul.addr %s339, 8
        %s347 = sadd.s32 %s345, %s346
        %s348 = smul.addr %s347, 8
        %s349 = scalar_lea.vmem %s3, %s348
        %s350 = smul.u32 2, %s26
        %s351 = smul.u32 2, %s26
        %v352 = vld [vmem:[%s317] sm:$0xff]
        %v353 = vld [vmem:[%s317 + $0x8] sm:$0xff]
        %v354 = vmul.f32 %v352, 0.17677669
        %v355 = vmul.f32 %v353, 0.17677669
        %v356 = vld [vmem:[%s327] sm:$0xff]
        %v357 = vld [vmem:[%s327 + $0x8] sm:$0xff]
        %v358 = vld [vmem:[%s336] sm:$0xff]
        %v359 = vld [vmem:[%s336 + $0x8] sm:$0xff]
        %vm360 = vcmask 261120
        %v362 = vsel %vm360, %v354, 0
        %v365 = vsel %vm360, %v355, 0
        %v368 = vsel %vm360, %v356, 0
        %v371 = vsel %vm360, %v357, 0
        %373 = vmatpush.xpose.msra.mxu0 0.0
        %374 = vmatpush.xpose.msra.mxu0 0.0
        %375 = vmatpush.xpose.msra.mxu0 0.0
        %376 = vmatpush.xpose.msra.mxu0 0.0
        %377 = vmatpush.xpose.msra.mxu0 0.0
        %378 = vmatpush.xpose.msra.mxu0 0.0
        %379 = vmatpush.xpose.msra.mxu0 0.0
        %380 = vmatpush.xpose.msra.mxu0 0.0
        %381 = vmatpush.xpose.msra.mxu0 0.0
        %382 = vmatpush.xpose.msra.mxu0 0.0
        %383 = vmatpush.xpose.msra.mxu0 0.0
        %384 = vmatpush.xpose.msra.mxu0 0.0
        %385 = vmatpush.xpose.msra.mxu0 0.0
        %386 = vmatpush.xpose.msra.mxu0 0.0
        %387 = vmatpush.xpose.msra.mxu0 %v371
        %388 = vmatpush.xpose.msra.mxu0 %v368
        %389 = vmatmul.f32.gmra.mxu0 %v362
        %v390 = vpop.f32.mrf.mxu0
        %v391 = vadd.f32 0.0, %v390
        %392 = vmatmul.f32.gmra.mxu0 %v365
        %v393 = vpop.f32.mrf.mxu0
        %v394 = vadd.f32 0.0, %v393
        %395 = vdwg.mxu0
        %vm396 = vcmask 130048
        %v397 = vsel %vm396, %v391, -inf
        %398 = vmax.xlane.f32.xlu0 %v397
        %v399 = vpop.xlane.xlu0 %398
        %v400 = vsel %vm396, %v394, -inf
        %401 = vmax.xlane.f32.xlu0 %v400
        %v402 = vpop.xlane.xlu0 %401
        %v403 = vsub.f32 %v391, %v399
        %v404 = vsub.f32 %v394, %v402
        %v405 = vmul.f32 %v403, 1.442695
        %v406 = vpow.pop %v405
        %v407 = vmul.f32 %v404, 1.442695
        %v408 = vpow.pop %v407
        %v409 = vsel %vm396, %v406, 0.0
        %410 = vadd.xlane.f32.xlu0 %v409
        %v411 = vpop.xlane.xlu0 %410
        %v412 = vsel %vm396, %v408, 0.0
        %413 = vadd.xlane.f32.xlu0 %v412
        %v414 = vpop.xlane.xlu0 %413
        %v415 = vrcp.pop %v411
        %v416 = vrcp.pop %v414
        %v417 = vmul.f32 %v411, %v415
        %v418 = vmul.f32 %v414, %v416
        %v419 = vsub.f32 2.0, %v417
        %v420 = vsub.f32 2.0, %v418
        %v421 = vmul.f32 %v415, %v419
        %v422 = vmul.f32 %v416, %v420
        %v423 = vmul.f32 %v406, %v421
        %v424 = vmul.f32 %v408, %v422
        %425 = vst.msk [vmem:[%s304] sm:$0xff] %vm396, %v423
        %426 = vst.msk [vmem:[%s304 + $0x8] sm:$0xff] %vm396, %v424
        %v428 = vsel %vm396, %v423, 0
        %v431 = vsel %vm396, %v424, 0
        %433 = vmatpush.msra.mxu0 0.0
        %434 = vmatpush.msra.mxu0 0.0
        %435 = vmatpush.msra.mxu0 0.0
        %436 = vmatpush.msra.mxu0 0.0
        %437 = vmatpush.msra.mxu0 0.0
        %438 = vmatpush.msra.mxu0 0.0
        %439 = vmatpush.msra.mxu0 0.0
        %440 = vmatpush.msra.mxu0 0.0
        %441 = vmatpush.msra.mxu0 0.0
        %442 = vmatpush.msra.mxu0 0.0
        %443 = vmatpush.msra.mxu0 0.0
        %444 = vmatpush.msra.mxu0 0.0
        %445 = vmatpush.msra.mxu0 0.0
        %446 = vmatpush.msra.mxu0 0.0
        %447 = vmatpush.msra.mxu0 %v359
        %448 = vmatpush.msra.mxu0 %v358
        %449 = vmatmul.f32.gmra.mxu0 %v428
        %v450 = vpop.f32.mrf.mxu0
        %v451 = vadd.f32 0.0, %v450
        %452 = vmatmul.f32.gmra.mxu0 %v431
        %v453 = vpop.f32.mrf.mxu0
        %v454 = vadd.f32 0.0, %v453
        %455 = vdwg.mxu0
        %456 = vst.msk [vmem:[%s349] sm:$0xff] %vm360, %v451
        %457 = vst.msk [vmem:[%s349 + $0x8] sm:$0xff] %vm360, %v454
        %s458 = smul.u32 2, %s26
        %p459 = scmp.lt.s32.totalorder %s24, 1
        %s460 = scalar_select %p459, %s24, 1
        %p461 = scmp.lt.s32.totalorder %s25, 3
        %s462 = scalar_select %p461, %s25, 3
        %p463 = scmp.lt.s32.totalorder %s458, 1
        %s464 = scalar_select %p463, %s458, 1
        %s465 = smul.addr %s462, 2
        %s466 = sadd.s32 %s464, %s465
        %s467 = smul.addr %s460, 8
        %s468 = sadd.s32 %s466, %s467
        %s469 = smul.addr %s468, 8
        %s470 = scalar_lea.vmem %s3, %s469
        %s471 = sand.u32 %s166, 1
        %s472 = scalar_lea.sflag [#allocation3], %s471
        %s473 = sand.u32 %s166, 1
        %s474 = smul.addr %s473, 16
        %s475 = scalar_lea.vmem [#allocation2], %s474
        // Predicated region
        $region33: #{full_attention.1} parent=31 // pred_check
          %p476 = pneg %p146
        $region34: #{full_attention.1} parent=31 // pred_check_branch
          %478 = sbr.rel (%p476) target = $region36
        $region35: #{full_attention.1} parent=31 // pred_region
          %s479 = smul.u32 2, %s26
        $region36: #{full_attention.1} parent=31 // pred_fallthru
          _
        // Predicated region
        $region37: #{full_attention.1} parent=31 // pred_check
          %p480 = pneg %p176
        $region38: #{full_attention.1} parent=31 // pred_check_branch
          %482 = sbr.rel (%p480) target = $region40
        $region39: #{full_attention.1} parent=31 // pred_region
          %s483 = smul.u32 2, %s26
          %485 = vsyncadd %s472, 0
          %s486 = smul.addr %s25, 2
          %s487 = sadd.s32 %s483, %s486
          %s488 = smul.addr %s24, 8
          %s489 = sadd.s32 %s487, %s488
          %s490 = smul.addr %s489, 8
          %s491 = scalar_lea.hbm %s4, %s490
          %s492 = sshll.u32 %s475, 4
          %s493 = int_to_ptr.vmem [resolvable:$true] %s492
          %s494 = sshll.u32 %s491, 4
          %s495 = int_to_ptr.hbm [resolvable:$true] %s494
          %500 = dma.vmem_to_hbm [thread:$0]  %s493, 256, %s495, %s472, 128, 128, 8
        $region40: #{full_attention.1} parent=31 // pred_fallthru
          _
      $region32: #{full_attention.1} parent=5 // pred_fallthru
        _
      %p501 = scmp.le.s32.totalorder 2, %s14
      // Predicated region
      $region41: #{full_attention.1} parent=5 // pred_check
        %p502 = pneg %p501
      $region42: #{full_attention.1} parent=5 // pred_check_branch
        %504 = sbr.rel (%p502) target = $region44
      $region43: #{full_attention.1} parent=5 // pred_region
        %s505 = ssub.s32 %s14, 2
        // Predicated region
        $region45: #{full_attention.1} parent=43 // pred_check
          %p506 = pneg %p152
        $region46: #{full_attention.1} parent=43 // pred_check_branch
          %508 = sbr.rel (%p506) target = $region48
        $region47: #{full_attention.1} parent=43 // pred_region
          %s509 = smul.u32 2, %s29
          %p510 = scmp.lt.s32.totalorder %s27, 1
          %s511 = scalar_select %p510, %s27, 1
          %p512 = scmp.lt.s32.totalorder %s28, 3
          %s513 = scalar_select %p512, %s28, 3
          %p514 = scmp.lt.s32.totalorder %s509, 1
          %s515 = scalar_select %p514, %s509, 1
          %s516 = smul.addr %s513, 2
          %s517 = sadd.s32 %s515, %s516
          %s518 = smul.addr %s511, 8
          %s519 = sadd.s32 %s517, %s518
          %s520 = smul.addr %s519, 8
          %s521 = scalar_lea.vmem %s3, %s520
        $region48: #{full_attention.1} parent=43 // pred_fallthru
          _
        // Predicated region
        $region49: #{full_attention.1} parent=43 // pred_check
          %p522 = pneg %p182
        $region50: #{full_attention.1} parent=43 // pred_check_branch
          %524 = sbr.rel (%p522) target = $region52
        $region51: #{full_attention.1} parent=43 // pred_region
          %s525 = sand.u32 %s167, 1
          %s526 = scalar_lea.sflag [#allocation3], %s525
          %s527 = sand.u32 %s167, 1
          %s528 = smul.addr %s527, 16
          %s529 = scalar_lea.vmem [#allocation2], %s528
          %531 = dma.done %s526, 256
        $region52: #{full_attention.1} parent=43 // pred_fallthru
          _
      $region44: #{full_attention.1} parent=5 // pred_fallthru
        _
    $region6: #{full_attention.1} parent=1 // loop_footer
      %s18 = sadd.s32 1, %s14
    $region7: #{full_attention.1} parent=1 // loop_footer_branch
      %13 = sbr.rel target = $region3
    $region8: #{full_attention.1} parent=1 // loop_exit
      _
    %532 = vsyncpa [#allocation3], 1
    %s533 = scalar_lea.sflag [#allocation3], 1
    %534 = vsyncpa %s533, 1

</llo_original>
